<compile_context>
chip_gen: v6e
topology: v6e:2x2x1
jax: 0.10.0
libtpu: 0.0.40
codegen_flags: <defaults>
</compile_context>

<pallas_src>
import jax
import jax.numpy as jnp
from jax.experimental import pallas as pl
from jax.experimental.pallas import tpu as pltpu


def _relu_kernel(x_ref, o_ref):
    # Elementwise max(x, 0) on the current VMEM tile (VPU).
    o_ref[...] = jnp.maximum(x_ref[...], jnp.zeros((), x_ref.dtype))


_LANE = 128
_COL_CANDIDATES = (4096, 2048, 1024, 512, 256, 128)  # lane-dense last dims
_TARGET_BLOCK_BYTES = 2 * 1024 * 1024                # ~2 MiB per grid step


def _sublane_multiple(dtype) -> int:
    # f32 -> 8, bf16 -> 16, int8/fp8 -> 32 (packed sublanes).
    itemsize = jnp.dtype(dtype).itemsize
    return max(8, 32 // max(itemsize, 1))


def relu(x: jax.Array) -> jax.Array:
    """ReLU over an arbitrarily shaped array, computed in a Pallas kernel."""
    orig_shape = x.shape
    dtype = x.dtype
    n = x.size
    if n == 0:
        return x

    itemsize = jnp.dtype(dtype).itemsize
    sub_mult = _sublane_multiple(dtype)

    x_flat = jnp.ravel(x)  # reshape of contiguous array: no HBM copy

    # Pad only in the rare non-divisible case (extra HBM pass otherwise avoided).
    n_pad = n
    if n % _LANE != 0:
        n_pad = pl.cdiv(n, _LANE) * _LANE
        x_flat = jnp.pad(x_flat, (0, n_pad - n))  # zero pad is safe for ReLU

    # Pick a wide, lane-dense column count that divides n_pad exactly,
    # preferring factorizations that give at least `sub_mult` rows.
    cols = None
    for c in _COL_CANDIDATES:
        if n_pad % c == 0 and (n_pad // c) >= sub_mult:
            cols = c
            break
    if cols is None:
        for c in _COL_CANDIDATES:
            if n_pad % c == 0:
                cols = c
                break
    rows = n_pad // cols

    # Block row count: ~2 MiB blocks, multiple of the sublane packing factor.
    if rows <= sub_mult:
        block_rows = rows  # single full-array block (equal-to-full-dim is allowed)
    else:
        block_rows = _TARGET_BLOCK_BYTES // (cols * itemsize)
        block_rows = max(sub_mult, (block_rows // sub_mult) * sub_mult)
        block_rows = min(block_rows, (rows // sub_mult) * sub_mult)
        # Keep >= 2 grid steps so the 'parallel' axis can be sharded across
        # TensorCores on v7x; measured ~neutral on single-TC v5e/v6e.
        if pl.cdiv(rows, block_rows) < 2:
            block_rows = max(sub_mult, (pl.cdiv(rows, 2) // sub_mult) * sub_mult)

    grid = (pl.cdiv(rows, block_rows),)
    x2d = x_flat.reshape(rows, cols)

    out2d = pl.pallas_call(
        _relu_kernel,
        out_shape=jax.ShapeDtypeStruct((rows, cols), dtype),
        grid_spec=pltpu.PrefetchScalarGridSpec(
            num_scalar_prefetch=0,
            grid=grid,
            in_specs=[pl.BlockSpec((block_rows, cols), lambda i: (i, 0))],
            out_specs=pl.BlockSpec((block_rows, cols), lambda i: (i, 0)),
        ),
        compiler_params=pltpu.CompilerParams(
            dimension_semantics=("parallel",),
            # 2 arrays x 2 buffers x ~2 MiB stays well inside this on all of
            # v5e (128 MiB phys), v6e (128 MiB), v7x (64 MiB).
            vmem_limit_bytes=32 * 1024 * 1024,
        ),
        cost_estimate=pl.CostEstimate(
            flops=n_pad,
            transcendentals=0,
            bytes_accessed=2 * n_pad * itemsize,
        ),
    )(x2d)

    if n_pad == n:
        return out2d.reshape(orig_shape)
    return out2d.reshape(-1)[:n].reshape(orig_shape)


if __name__ == "__main__":
    key = jax.random.PRNGKey(0)

    # Small NCHW input consistent with a typical conv-net activation.
    x = jax.random.normal(key, (2, 4, 16, 16), dtype=jnp.float32)
    y = relu(x)
    jax.block_until_ready(y)
    assert y.shape == x.shape and y.dtype == x.dtype
    assert jnp.array_equal(y, jnp.maximum(x, 0.0))

    # Ragged element count (exercises the rare pad/slice path).
    x2 = jax.random.normal(jax.random.PRNGKey(0), (3, 5, 7), dtype=jnp.float32)
    y2 = relu(x2)
    jax.block_until_ready(y2)
    assert jnp.array_equal(y2, jnp.maximum(x2, 0.0))

    # bf16 (exercises the 16-row sublane multiple).
    x3 = jax.random.normal(jax.random.PRNGKey(0), (2, 4, 16, 16)).astype(jnp.bfloat16)
    y3 = relu(x3)
    jax.block_until_ready(y3)
    assert jnp.array_equal(y3, jnp.maximum(x3, jnp.zeros((), jnp.bfloat16)))

    print("KERNEL_OK")
</pallas_src>

<mosaic_0001>
module attributes {stable_mosaic.version = 11 : i64} {
  func.func @_relu_kernel(%arg0: i32, %arg1: memref<8x256xf32, #tpu.memory_space<vmem>>, %arg2: memref<8x256xf32, #tpu.memory_space<vmem>>) attributes {dimension_semantics = [#tpu.dimension_semantics<parallel>], iteration_bounds = array<i64: 1>, scalar_prefetch = 0 : i64, scratch_operands = 0 : i64, tpu.core_type = #tpu.core_type<tc>, window_params = [{transform_indices = @transform_0, window_bounds = array<i64: 8, 256>}, {transform_indices = @transform_1, window_bounds = array<i64: 8, 256>}]} {
    %c0 = arith.constant 0 : index
    %c0_0 = arith.constant 0 : index
    %0 = vector.load %arg1[%c0, %c0_0] : memref<8x256xf32, #tpu.memory_space<vmem>>, vector<8x256xf32>
    %cst = arith.constant 0.000000e+00 : f32
    %1 = vector.broadcast %cst : f32 to vector<8x256xf32>
    %2 = arith.maximumf %0, %1 : vector<8x256xf32>
    %c0_1 = arith.constant 0 : index
    %c0_2 = arith.constant 0 : index
    %3 = vector.load %arg2[%c0_1, %c0_2] : memref<8x256xf32, #tpu.memory_space<vmem>>, vector<8x256xf32>
    tpu.vector_store %arg2[%c0_1, %c0_2], %2 {strides = array<i32>} : memref<8x256xf32, #tpu.memory_space<vmem>>, vector<8x256xf32>,
    return
  }
  func.func @transform_0(%arg0: i32) -> (i32, i32) {
    %c0_i32 = arith.constant 0 : i32
    %c0_i32_0 = arith.constant 0 : i32
    return %arg0, %c0_i32 : i32, i32
  }
  func.func @transform_1(%arg0: i32) -> (i32, i32) {
    %c0_i32 = arith.constant 0 : i32
    %c0_i32_0 = arith.constant 0 : i32
    return %arg0, %c0_i32 : i32, i32
  }
}

</mosaic_0001>

<llo_original>
// kernel: tpu_custom_call.1
$region0: #{tpu_custom_call.1}
  #allocation0 [shape = 'u32[]', space=smem, size = 0x4, offset = 0x4, fixed_abs, tag = 'smem constant byte address 0x4 - core index']
  #allocation1 [shape = 'u32[144,128]{1,0:T(1,128)}', space=vmem, size = 0x12000, scoped, tag = 'internal scratch']
  %s0 = inlined_call_operand.hbm [shape: f32[8,256], index: 0, kind: input, shape index: {}]
  %s1 = inlined_call_operand.hbm [shape: f32[8,256], index: 1, kind: output, shape index: {}]
  %s2 = sld [smem:[#allocation0]]
  $region18: #{tpu_custom_call.1} parent=0
    _
  %s4 = ssub.s32 1, %s2
  %s5 = scalar_select 0, %s4, %s2
  $region1: #{tpu_custom_call.1} parent=0
    #allocation2 [shape = 'u8[8192]{0}', space=vmem, size = 0x2000, scoped, tag = 'input window, operand 0, single buffered']
    #allocation3 [shape = 's32[1]{0}', space=sflag, size = 0x4, scoped, tag = 'scoped memory for tpu_custom_call.1']
    #allocation4 [shape = 's32[1]{0}', space=sflag, size = 0x4, scoped, tag = 'scoped memory for tpu_custom_call.1']
    #allocation5 [shape = 'u8[8192]{0}', space=vmem, size = 0x2000, scoped, tag = 'output window, operand 0, single buffered']
    %6 = vsyncpa [#allocation3], 0
    %7 = vsyncpa [#allocation4], 0
    // Predicated region
    $region2: #{tpu_custom_call.1} parent=1 // pred_check
      _
    $region3: #{tpu_custom_call.1} parent=1 // pred_check_branch
      %9 = sbr.rel (0) target = $region5
    $region4: #{tpu_custom_call.1} parent=1 // pred_region
      %s11 = ssub.s32 256, 256
      %12 = vsyncadd [#allocation3], %s11
      %s14 = sshll.u32 [#allocation2], 4
      %s15 = int_to_ptr.vmem [resolvable:$true] %s14
      %17 = dma.hbm_to_vmem [thread:$0]  %s0, 256, %s15, [#allocation3]
    $region5: #{tpu_custom_call.1} parent=1 // pred_fallthru
      _
    // Predicated region
    $region6: #{tpu_custom_call.1} parent=1 // pred_check
      _
    $region7: #{tpu_custom_call.1} parent=1 // pred_check_branch
      %19 = sbr.rel (0) target = $region9
    $region8: #{tpu_custom_call.1} parent=1 // pred_region
      %20 = dma.done [#allocation3], 256
    $region9: #{tpu_custom_call.1} parent=1 // pred_fallthru
      _
    %v21 = vld [vmem:[#allocation2] sm:$0xff]
    %v22 = vld [vmem:[#allocation2 + $0x8] sm:$0xff]
    %v23 = vmax.f32 %v21, 0.0
    %v24 = vmax.f32 %v22, 0.0
    %25 = vst [vmem:[#allocation5] sm:$0xff] %v23
    %26 = vst [vmem:[#allocation5 + $0x8] sm:$0xff] %v24
    // Predicated region
    $region10: #{tpu_custom_call.1} parent=1 // pred_check
      _
    $region11: #{tpu_custom_call.1} parent=1 // pred_check_branch
      %28 = sbr.rel (0) target = $region13
    $region12: #{tpu_custom_call.1} parent=1 // pred_region
      %s30 = ssub.s32 256, 256
      %31 = vsyncadd [#allocation4], %s30
      %s33 = sshll.u32 [#allocation5], 4
      %s34 = int_to_ptr.vmem [resolvable:$true] %s33
      %36 = dma.vmem_to_hbm [thread:$0]  %s34, 256, %s1, [#allocation4]
    $region13: #{tpu_custom_call.1} parent=1 // pred_fallthru
      _
    // Predicated region
    $region14: #{tpu_custom_call.1} parent=1 // pred_check
      _
    $region15: #{tpu_custom_call.1} parent=1 // pred_check_branch
      %38 = sbr.rel (0) target = $region17
    $region16: #{tpu_custom_call.1} parent=1 // pred_region
      %39 = dma.done [#allocation4], 256
    $region17: #{tpu_custom_call.1} parent=1 // pred_fallthru
      _
    %40 = vsyncpa [#allocation3], 1
    %41 = vsyncpa [#allocation4], 1

</llo_original>
